<compile_context>
chip_gen: v5e
topology: v5e:2x2
jax: 0.10.0
libtpu: 0.0.40
codegen_flags: <defaults>
</compile_context>

<pallas_src>
import numpy as np
import jax
import jax.numpy as jnp
from jax.experimental import pallas as pl
from jax.experimental.pallas import tpu as pltpu

# ---------------- problem sizes ----------------
N = 64            # total nodes (2 graphs x 32 nodes)
D = 128           # hidden dim
B = 2             # batch size (number of graphs)
NUM_LAYERS = 2
NUM_NODETYPES = 16
NUM_NODEATTRIBUTES = 32
MAX_DEPTH = 20
BN_EPS = 1e-5


# ---------------- fused Pallas kernel ----------------
def gnn_forward_pallas(one_plus_eps, h0, A, S, P,
                       gw1, gb1, gw2, gb2, vw1, vb1, vw2, vb2, vn0):
    """Fused forward: all GIN layers + virtual-node MLPs in a single pallas_call."""
    n, d = h0.shape
    b = P.shape[0]
    num_layers = gw1.shape[0]

    def kernel(ope_ref, h0_ref, a_ref, s_ref, p_ref,
               gw1_ref, gb1_ref, gw2_ref, gb2_ref,
               vw1_ref, vb1_ref, vw2_ref, vb2_ref, vn0_ref,
               out_ref):
        h = h0_ref[...]                                  # (N, D)
        adj = a_ref[...]                                 # (N, N)
        sel = s_ref[...]                                 # (N, B) node->graph one-hot
        pool = p_ref[...]                                # (B, N) graph sum-pool matrix
        vn = jnp.broadcast_to(vn0_ref[...], (b, d))      # (B, D) virtual-node state

        for layer in range(num_layers):                  # static unroll; data stays in VMEM
            # broadcast_nodes: vn_bc[r] = vn[batch_id[r]]   (pure VPU broadcast-select)
            vn_bc = sel[:, 0:1] * vn[0:1, :]
            for g in range(1, b):
                vn_bc = vn_bc + sel[:, g:g + 1] * vn[g:g + 1, :]
            h_in = h + vn_bc                             # h_list[layer] += vn[batch_id]

            # GINConv: (1+eps)*h_in + sum over incoming edges of relu(h_in[src])   (MXU)
            agg = jnp.dot(adj, jnp.maximum(h_in, 0.0),
                          preferred_element_type=jnp.float32)
            z = ope_ref[layer] * h_in + agg              # (1+eps) scalar from SMEM

            # GIN mlp with BN folded into the Linears: Lin -> ReLU -> Lin (+ outer BN folded)
            y = jnp.dot(z, gw1_ref[layer],
                        preferred_element_type=jnp.float32) + gb1_ref[layer]
            y = jnp.maximum(y, 0.0)
            y = jnp.dot(y, gw2_ref[layer],
                        preferred_element_type=jnp.float32) + gb2_ref[layer]

            if layer < num_layers - 1:
                y = jnp.maximum(y, 0.0)                  # post-BN ReLU (all but last layer)
                # virtual-node update: MLP(sum-pool(h_in) + vn), BN folded
                pooled = jnp.dot(pool, h_in,
                                 preferred_element_type=jnp.float32) + vn
                u = jnp.dot(pooled, vw1_ref[layer],
                            preferred_element_type=jnp.float32) + vb1_ref[layer]
                u = jnp.maximum(u, 0.0)
                vn = jnp.dot(u, vw2_ref[layer],
                             preferred_element_type=jnp.float32) + vb2_ref[layer]
                vn = jnp.maximum(vn, 0.0)
            h = y

        out_ref[...] = h.astype(out_ref.dtype)

    vmem = pl.BlockSpec(memory_space=pltpu.MemorySpace.VMEM)
    smem = pl.BlockSpec(memory_space=pltpu.MemorySpace.SMEM)
    return pl.pallas_call(
        kernel,
        out_shape=jax.ShapeDtypeStruct((n, d), jnp.float32),
        in_specs=[smem] + [vmem] * 13,
        out_specs=vmem,
    )(one_plus_eps, h0, A, S, P, gw1, gb1, gw2, gb2, vw1, vb1, vw2, vb2, vn0)


# ---------------- host glue ----------------
def _fold_bn(w, bias, scale, shift):
    # (x @ w + bias) * scale + shift  ==  x @ (w * scale) + (bias * scale + shift)
    return w * scale, bias * scale + shift


def forward(params, node_feat, depth, A, batch_id, P):
    del batch_id  # encoded in S = P.T inside the kernel
    # ASTNodeEncoder: three embedding gathers (host/XLA glue)
    h0 = (params["type_emb"][node_feat[:, 0]]
          + params["attr_emb"][node_feat[:, 1]]
          + params["depth_emb"][jnp.minimum(depth, MAX_DEPTH)]).astype(jnp.float32)

    S = P.T                                               # (N, B) node->graph one-hot

    # fold eval-mode BatchNorm into the preceding Linear; stack weights per layer
    gw1, gb1, gw2, gb2, ope = [], [], [], [], []
    for lp in params["gin"]:
        w1, b1 = _fold_bn(lp["w1"], lp["b1"], lp["s1"], lp["t1"])   # mlp Linear + BN
        w2, b2 = _fold_bn(lp["w2"], lp["b2"], lp["s2"], lp["t2"])   # 2nd Linear + outer BN
        gw1.append(w1); gb1.append(b1); gw2.append(w2); gb2.append(b2)
        ope.append(1.0 + lp["eps"][0, 0])
    vw1, vb1, vw2, vb2 = [], [], [], []
    for vp in params["vn_mlp"]:
        w1, b1 = _fold_bn(vp["w1"], vp["b1"], vp["s1"], vp["t1"])
        w2, b2 = _fold_bn(vp["w2"], vp["b2"], vp["s2"], vp["t2"])
        vw1.append(w1); vb1.append(b1); vw2.append(w2); vb2.append(b2)

    stk = lambda xs: jnp.stack(xs, axis=0)
    return gnn_forward_pallas(
        jnp.stack(ope).astype(jnp.float32), h0, A, S, P,
        stk(gw1), stk(gb1), stk(gw2), stk(gb2),
        stk(vw1), stk(vb1), stk(vw2), stk(vb2),
        params["vn_emb"])


# ---------------- pure-JAX reference ----------------
def reference(params, node_feat, depth, A, batch_id, P, num_layers):
    h = (params["type_emb"][node_feat[:, 0]]
         + params["attr_emb"][node_feat[:, 1]]
         + params["depth_emb"][jnp.minimum(depth, MAX_DEPTH)])
    vn = jnp.broadcast_to(params["vn_emb"], (P.shape[0], D)).astype(jnp.float32)
    for layer in range(num_layers):
        lp = params["gin"][layer]
        h_in = h + vn[batch_id]
        agg = A @ jnp.maximum(h_in, 0.0)
        z = (1.0 + lp["eps"][0, 0]) * h_in + agg
        y = jnp.maximum((z @ lp["w1"] + lp["b1"]) * lp["s1"] + lp["t1"], 0.0)
        y = (y @ lp["w2"] + lp["b2"]) * lp["s2"] + lp["t2"]
        if layer < num_layers - 1:
            y = jnp.maximum(y, 0.0)
            vp = params["vn_mlp"][layer]
            pooled = P @ h_in + vn
            u = jnp.maximum((pooled @ vp["w1"] + vp["b1"]) * vp["s1"] + vp["t1"], 0.0)
            vn = jnp.maximum((u @ vp["w2"] + vp["b2"]) * vp["s2"] + vp["t2"], 0.0)
        h = y
    return h


# ---------------- deterministic parameter init ----------------
def init_params(key):
    bn_scale = jnp.full((1, D), 1.0 / np.sqrt(1.0 + BN_EPS), jnp.float32)  # gamma=1, var=1
    bn_shift = jnp.zeros((1, D), jnp.float32)                              # beta=0, mean=0

    keys = iter(jax.random.split(key, 64))
    lin = lambda: 0.1 * jax.random.normal(next(keys), (D, D), jnp.float32)
    bias = lambda: 0.05 * jax.random.normal(next(keys), (1, D), jnp.float32)

    gin_layers = []
    for _ in range(NUM_LAYERS):
        gin_layers.append(dict(
            eps=jnp.zeros((1, 1), jnp.float32),              # nn.Parameter([0])
            w1=lin(), b1=bias(), s1=bn_scale, t1=bn_shift,   # mlp Linear + BN
            w2=lin(), b2=bias(),                             # mlp second Linear
            s2=bn_scale, t2=bn_shift,                        # outer batch_norms[layer]
        ))
    vn_mlps = []
    for _ in range(NUM_LAYERS - 1):
        vn_mlps.append(dict(
            w1=lin(), b1=bias(), s1=bn_scale, t1=bn_shift,
            w2=lin(), b2=bias(), s2=bn_scale, t2=bn_shift,
        ))
    return dict(
        type_emb=0.1 * jax.random.normal(next(keys), (NUM_NODETYPES, D), jnp.float32),
        attr_emb=0.1 * jax.random.normal(next(keys), (NUM_NODEATTRIBUTES, D), jnp.float32),
        depth_emb=0.1 * jax.random.normal(next(keys), (MAX_DEPTH + 1, D), jnp.float32),
        vn_emb=jnp.zeros((1, D), jnp.float32),               # nn.init.constant_(..., 0)
        gin=gin_layers, vn_mlp=vn_mlps,
    )


if __name__ == "__main__":
    key = jax.random.PRNGKey(0)
    k_param, k_type, k_attr, k_depth, k_adj = jax.random.split(key, 5)
    params = init_params(k_param)

    # node inputs
    node_feat = jnp.stack(
        [jax.random.randint(k_type, (N,), 0, NUM_NODETYPES),
         jax.random.randint(k_attr, (N,), 0, NUM_NODEATTRIBUTES)], axis=1).astype(jnp.int32)
    depth = jax.random.randint(k_depth, (N,), 0, 2 * MAX_DEPTH).astype(jnp.int32)

    # graph: 2 graphs of 32 nodes each, random intra-graph edges (dense A[dst, src])
    batch_id = jnp.concatenate(
        [jnp.zeros((N // B,), jnp.int32), jnp.ones((N // B,), jnp.int32)])
    same_graph = (batch_id[:, None] == batch_id[None, :]).astype(jnp.float32)
    A = jax.random.bernoulli(k_adj, 0.15, (N, N)).astype(jnp.float32) * same_graph
    P = (jnp.arange(B, dtype=jnp.int32)[:, None] == batch_id[None, :]).astype(jnp.float32)

    fwd = jax.jit(forward)   # host glue (gathers, BN folding) fuses into one dispatch
    out = jax.block_until_ready(fwd(params, node_feat, depth, A, batch_id, P))

    ref = jax.block_until_ready(
        reference(params, node_feat, depth, A, batch_id, P, NUM_LAYERS))
    np.testing.assert_allclose(np.asarray(out), np.asarray(ref), rtol=2e-2, atol=2e-2)

    print("KERNEL_OK")
</pallas_src>

<mosaic_0001>
module attributes {stable_mosaic.version = 11 : i64} {
  func.func @kernel(%arg0: memref<2xf32, #tpu.memory_space<smem>>, %arg1: memref<64x128xf32, #tpu.memory_space<vmem>>, %arg2: memref<64x64xf32, #tpu.memory_space<vmem>>, %arg3: memref<64x2xf32, #tpu.memory_space<vmem>>, %arg4: memref<2x64xf32, #tpu.memory_space<vmem>>, %arg5: memref<2x128x128xf32, #tpu.memory_space<vmem>>, %arg6: memref<2x1x128xf32, #tpu.memory_space<vmem>>, %arg7: memref<2x128x128xf32, #tpu.memory_space<vmem>>, %arg8: memref<2x1x128xf32, #tpu.memory_space<vmem>>, %arg9: memref<1x128x128xf32, #tpu.memory_space<vmem>>, %arg10: memref<1x1x128xf32, #tpu.memory_space<vmem>>, %arg11: memref<1x128x128xf32, #tpu.memory_space<vmem>>, %arg12: memref<1x1x128xf32, #tpu.memory_space<vmem>>, %arg13: memref<1x128xf32, #tpu.memory_space<vmem>>, %arg14: memref<64x128xf32, #tpu.memory_space<vmem>>) attributes {dimension_semantics = [], scalar_prefetch = 0 : i64, scratch_operands = 0 : i64, tpu.core_type = #tpu.core_type<tc>} {
    %c0 = arith.constant 0 : index
    %c0_0 = arith.constant 0 : index
    %0 = vector.load %arg1[%c0, %c0_0] : memref<64x128xf32, #tpu.memory_space<vmem>>, vector<64x128xf32>
    %c0_1 = arith.constant 0 : index
    %c0_2 = arith.constant 0 : index
    %1 = vector.load %arg2[%c0_1, %c0_2] : memref<64x64xf32, #tpu.memory_space<vmem>>, vector<64x64xf32>
    %c0_3 = arith.constant 0 : index
    %c0_4 = arith.constant 0 : index
    %2 = vector.load %arg3[%c0_3, %c0_4] : memref<64x2xf32, #tpu.memory_space<vmem>>, vector<64x2xf32>
    %c0_5 = arith.constant 0 : index
    %c0_6 = arith.constant 0 : index
    %3 = vector.load %arg4[%c0_5, %c0_6] : memref<2x64xf32, #tpu.memory_space<vmem>>, vector<2x64xf32>
    %c0_7 = arith.constant 0 : index
    %c0_8 = arith.constant 0 : index
    %4 = vector.load %arg13[%c0_7, %c0_8] : memref<1x128xf32, #tpu.memory_space<vmem>>, vector<1x128xf32>
    %5 = vector.shape_cast %4 : vector<1x128xf32> to vector<1x128xf32>
    %6 = vector.broadcast %5 : vector<1x128xf32> to vector<2x128xf32>
    %7 = vector.extract_strided_slice %2 {offsets = [0, 0], sizes = [64, 1], strides = [1, 1]} : vector<64x2xf32> to vector<64x1xf32>
    %8 = vector.extract_strided_slice %6 {offsets = [0, 0], sizes = [1, 128], strides = [1, 1]} : vector<2x128xf32> to vector<1x128xf32>
    %9 = vector.broadcast %7 : vector<64x1xf32> to vector<64x128xf32>
    %10 = vector.broadcast %8 : vector<1x128xf32> to vector<64x128xf32>
    %11 = arith.mulf %9, %10 : vector<64x128xf32>
    %12 = vector.extract_strided_slice %2 {offsets = [0, 1], sizes = [64, 1], strides = [1, 1]} : vector<64x2xf32> to vector<64x1xf32>
    %13 = vector.extract_strided_slice %6 {offsets = [1, 0], sizes = [1, 128], strides = [1, 1]} : vector<2x128xf32> to vector<1x128xf32>
    %14 = vector.broadcast %12 : vector<64x1xf32> to vector<64x128xf32>
    %15 = vector.broadcast %13 : vector<1x128xf32> to vector<64x128xf32>
    %16 = arith.mulf %14, %15 : vector<64x128xf32>
    %17 = arith.addf %11, %16 : vector<64x128xf32>
    %18 = arith.addf %0, %17 : vector<64x128xf32>
    %cst = arith.constant 0.000000e+00 : f32
    %19 = vector.broadcast %cst : f32 to vector<64x128xf32>
    %20 = arith.maximumf %18, %19 : vector<64x128xf32>
    %cst_9 = arith.constant dense<0.000000e+00> : vector<64x128xf32>
    %21 = tpu.matmul %1, %20, %cst_9 {dimension_numbers = #tpu.dot_dimension_numbers<[1], [0], [0], [1], [0, 0, 1, 1], [], []>} : vector<64x64xf32>, vector<64x128xf32>, vector<64x128xf32> -> vector<64x128xf32>
    %c0_10 = arith.constant 0 : index
    %22 = memref.load %arg0[%c0_10] : memref<2xf32, #tpu.memory_space<smem>>
    %23 = vector.broadcast %22 : f32 to vector<64x128xf32>
    %24 = arith.mulf %23, %18 : vector<64x128xf32>
    %25 = arith.addf %24, %21 : vector<64x128xf32>
    %c0_11 = arith.constant 0 : index
    %c0_12 = arith.constant 0 : index
    %c0_13 = arith.constant 0 : index
    %26 = vector.load %arg5[%c0_11, %c0_12, %c0_13] : memref<2x128x128xf32, #tpu.memory_space<vmem>>, vector<1x128x128xf32>
    %27 = vector.shape_cast %26 : vector<1x128x128xf32> to vector<128x128xf32>
    %cst_14 = arith.constant dense<0.000000e+00> : vector<64x128xf32>
    %28 = tpu.matmul %25, %27, %cst_14 {dimension_numbers = #tpu.dot_dimension_numbers<[1], [0], [0], [1], [0, 0, 1, 1], [], []>} : vector<64x128xf32>, vector<128x128xf32>, vector<64x128xf32> -> vector<64x128xf32>
    %c0_15 = arith.constant 0 : index
    %c0_16 = arith.constant 0 : index
    %c0_17 = arith.constant 0 : index
    %29 = vector.load %arg6[%c0_15, %c0_16, %c0_17] : memref<2x1x128xf32, #tpu.memory_space<vmem>>, vector<1x1x128xf32>
    %30 = vector.shape_cast %29 : vector<1x1x128xf32> to vector<1x128xf32>
    %31 = vector.broadcast %30 : vector<1x128xf32> to vector<64x128xf32>
    %32 = arith.addf %28, %31 : vector<64x128xf32>
    %cst_18 = arith.constant 0.000000e+00 : f32
    %33 = vector.broadcast %cst_18 : f32 to vector<64x128xf32>
    %34 = arith.maximumf %32, %33 : vector<64x128xf32>
    %c0_19 = arith.constant 0 : index
    %c0_20 = arith.constant 0 : index
    %c0_21 = arith.constant 0 : index
    %35 = vector.load %arg7[%c0_19, %c0_20, %c0_21] : memref<2x128x128xf32, #tpu.memory_space<vmem>>, vector<1x128x128xf32>
    %36 = vector.shape_cast %35 : vector<1x128x128xf32> to vector<128x128xf32>
    %cst_22 = arith.constant dense<0.000000e+00> : vector<64x128xf32>
    %37 = tpu.matmul %34, %36, %cst_22 {dimension_numbers = #tpu.dot_dimension_numbers<[1], [0], [0], [1], [0, 0, 1, 1], [], []>} : vector<64x128xf32>, vector<128x128xf32>, vector<64x128xf32> -> vector<64x128xf32>
    %c0_23 = arith.constant 0 : index
    %c0_24 = arith.constant 0 : index
    %c0_25 = arith.constant 0 : index
    %38 = vector.load %arg8[%c0_23, %c0_24, %c0_25] : memref<2x1x128xf32, #tpu.memory_space<vmem>>, vector<1x1x128xf32>
    %39 = vector.shape_cast %38 : vector<1x1x128xf32> to vector<1x128xf32>
    %40 = vector.broadcast %39 : vector<1x128xf32> to vector<64x128xf32>
    %41 = arith.addf %37, %40 : vector<64x128xf32>
    %cst_26 = arith.constant 0.000000e+00 : f32
    %42 = vector.broadcast %cst_26 : f32 to vector<64x128xf32>
    %43 = arith.maximumf %41, %42 : vector<64x128xf32>
    %cst_27 = arith.constant dense<0.000000e+00> : vector<2x128xf32>
    %44 = tpu.matmul %3, %18, %cst_27 {dimension_numbers = #tpu.dot_dimension_numbers<[1], [0], [0], [1], [0, 0, 1, 1], [], []>} : vector<2x64xf32>, vector<64x128xf32>, vector<2x128xf32> -> vector<2x128xf32>
    %45 = arith.addf %44, %6 : vector<2x128xf32>
    %c0_28 = arith.constant 0 : index
    %c0_29 = arith.constant 0 : index
    %c0_30 = arith.constant 0 : index
    %46 = vector.load %arg9[%c0_28, %c0_29, %c0_30] : memref<1x128x128xf32, #tpu.memory_space<vmem>>, vector<1x128x128xf32>
    %47 = vector.shape_cast %46 : vector<1x128x128xf32> to vector<128x128xf32>
    %cst_31 = arith.constant dense<0.000000e+00> : vector<2x128xf32>
    %48 = tpu.matmul %45, %47, %cst_31 {dimension_numbers = #tpu.dot_dimension_numbers<[1], [0], [0], [1], [0, 0, 1, 1], [], []>} : vector<2x128xf32>, vector<128x128xf32>, vector<2x128xf32> -> vector<2x128xf32>
    %c0_32 = arith.constant 0 : index
    %c0_33 = arith.constant 0 : index
    %c0_34 = arith.constant 0 : index
    %49 = vector.load %arg10[%c0_32, %c0_33, %c0_34] : memref<1x1x128xf32, #tpu.memory_space<vmem>>, vector<1x1x128xf32>
    %50 = vector.shape_cast %49 : vector<1x1x128xf32> to vector<1x128xf32>
    %51 = vector.broadcast %50 : vector<1x128xf32> to vector<2x128xf32>
    %52 = arith.addf %48, %51 : vector<2x128xf32>
    %cst_35 = arith.constant 0.000000e+00 : f32
    %53 = vector.broadcast %cst_35 : f32 to vector<2x128xf32>
    %54 = arith.maximumf %52, %53 : vector<2x128xf32>
    %c0_36 = arith.constant 0 : index
    %c0_37 = arith.constant 0 : index
    %c0_38 = arith.constant 0 : index
    %55 = vector.load %arg11[%c0_36, %c0_37, %c0_38] : memref<1x128x128xf32, #tpu.memory_space<vmem>>, vector<1x128x128xf32>
    %56 = vector.shape_cast %55 : vector<1x128x128xf32> to vector<128x128xf32>
    %cst_39 = arith.constant dense<0.000000e+00> : vector<2x128xf32>
    %57 = tpu.matmul %54, %56, %cst_39 {dimension_numbers = #tpu.dot_dimension_numbers<[1], [0], [0], [1], [0, 0, 1, 1], [], []>} : vector<2x128xf32>, vector<128x128xf32>, vector<2x128xf32> -> vector<2x128xf32>
    %c0_40 = arith.constant 0 : index
    %c0_41 = arith.constant 0 : index
    %c0_42 = arith.constant 0 : index
    %58 = vector.load %arg12[%c0_40, %c0_41, %c0_42] : memref<1x1x128xf32, #tpu.memory_space<vmem>>, vector<1x1x128xf32>
    %59 = vector.shape_cast %58 : vector<1x1x128xf32> to vector<1x128xf32>
    %60 = vector.broadcast %59 : vector<1x128xf32> to vector<2x128xf32>
    %61 = arith.addf %57, %60 : vector<2x128xf32>
    %cst_43 = arith.constant 0.000000e+00 : f32
    %62 = vector.broadcast %cst_43 : f32 to vector<2x128xf32>
    %63 = arith.maximumf %61, %62 : vector<2x128xf32>
    %64 = vector.extract_strided_slice %2 {offsets = [0, 0], sizes = [64, 1], strides = [1, 1]} : vector<64x2xf32> to vector<64x1xf32>
    %65 = vector.extract_strided_slice %63 {offsets = [0, 0], sizes = [1, 128], strides = [1, 1]} : vector<2x128xf32> to vector<1x128xf32>
    %66 = vector.broadcast %64 : vector<64x1xf32> to vector<64x128xf32>
    %67 = vector.broadcast %65 : vector<1x128xf32> to vector<64x128xf32>
    %68 = arith.mulf %66, %67 : vector<64x128xf32>
    %69 = vector.extract_strided_slice %2 {offsets = [0, 1], sizes = [64, 1], strides = [1, 1]} : vector<64x2xf32> to vector<64x1xf32>
    %70 = vector.extract_strided_slice %63 {offsets = [1, 0], sizes = [1, 128], strides = [1, 1]} : vector<2x128xf32> to vector<1x128xf32>
    %71 = vector.broadcast %69 : vector<64x1xf32> to vector<64x128xf32>
    %72 = vector.broadcast %70 : vector<1x128xf32> to vector<64x128xf32>
    %73 = arith.mulf %71, %72 : vector<64x128xf32>
    %74 = arith.addf %68, %73 : vector<64x128xf32>
    %75 = arith.addf %43, %74 : vector<64x128xf32>
    %cst_44 = arith.constant 0.000000e+00 : f32
    %76 = vector.broadcast %cst_44 : f32 to vector<64x128xf32>
    %77 = arith.maximumf %75, %76 : vector<64x128xf32>
    %cst_45 = arith.constant dense<0.000000e+00> : vector<64x128xf32>
    %78 = tpu.matmul %1, %77, %cst_45 {dimension_numbers = #tpu.dot_dimension_numbers<[1], [0], [0], [1], [0, 0, 1, 1], [], []>} : vector<64x64xf32>, vector<64x128xf32>, vector<64x128xf32> -> vector<64x128xf32>
    %c1 = arith.constant 1 : index
    %79 = memref.load %arg0[%c1] : memref<2xf32, #tpu.memory_space<smem>>
    %80 = vector.broadcast %79 : f32 to vector<64x128xf32>
    %81 = arith.mulf %80, %75 : vector<64x128xf32>
    %82 = arith.addf %81, %78 : vector<64x128xf32>
    %c1_46 = arith.constant 1 : index
    %c0_47 = arith.constant 0 : index
    %c0_48 = arith.constant 0 : index
    %83 = vector.load %arg5[%c1_46, %c0_47, %c0_48] : memref<2x128x128xf32, #tpu.memory_space<vmem>>, vector<1x128x128xf32>
    %84 = vector.shape_cast %83 : vector<1x128x128xf32> to vector<128x128xf32>
    %cst_49 = arith.constant dense<0.000000e+00> : vector<64x128xf32>
    %85 = tpu.matmul %82, %84, %cst_49 {dimension_numbers = #tpu.dot_dimension_numbers<[1], [0], [0], [1], [0, 0, 1, 1], [], []>} : vector<64x128xf32>, vector<128x128xf32>, vector<64x128xf32> -> vector<64x128xf32>
    %c1_50 = arith.constant 1 : index
    %c0_51 = arith.constant 0 : index
    %c0_52 = arith.constant 0 : index
    %86 = vector.load %arg6[%c1_50, %c0_51, %c0_52] : memref<2x1x128xf32, #tpu.memory_space<vmem>>, vector<1x1x128xf32>
    %87 = vector.shape_cast %86 : vector<1x1x128xf32> to vector<1x128xf32>
    %88 = vector.broadcast %87 : vector<1x128xf32> to vector<64x128xf32>
    %89 = arith.addf %85, %88 : vector<64x128xf32>
    %cst_53 = arith.constant 0.000000e+00 : f32
    %90 = vector.broadcast %cst_53 : f32 to vector<64x128xf32>
    %91 = arith.maximumf %89, %90 : vector<64x128xf32>
    %c1_54 = arith.constant 1 : index
    %c0_55 = arith.constant 0 : index
    %c0_56 = arith.constant 0 : index
    %92 = vector.load %arg7[%c1_54, %c0_55, %c0_56] : memref<2x128x128xf32, #tpu.memory_space<vmem>>, vector<1x128x128xf32>
    %93 = vector.shape_cast %92 : vector<1x128x128xf32> to vector<128x128xf32>
    %cst_57 = arith.constant dense<0.000000e+00> : vector<64x128xf32>
    %94 = tpu.matmul %91, %93, %cst_57 {dimension_numbers = #tpu.dot_dimension_numbers<[1], [0], [0], [1], [0, 0, 1, 1], [], []>} : vector<64x128xf32>, vector<128x128xf32>, vector<64x128xf32> -> vector<64x128xf32>
    %c1_58 = arith.constant 1 : index
    %c0_59 = arith.constant 0 : index
    %c0_60 = arith.constant 0 : index
    %95 = vector.load %arg8[%c1_58, %c0_59, %c0_60] : memref<2x1x128xf32, #tpu.memory_space<vmem>>, vector<1x1x128xf32>
    %96 = vector.shape_cast %95 : vector<1x1x128xf32> to vector<1x128xf32>
    %97 = vector.broadcast %96 : vector<1x128xf32> to vector<64x128xf32>
    %98 = arith.addf %94, %97 : vector<64x128xf32>
    %c0_61 = arith.constant 0 : index
    %c0_62 = arith.constant 0 : index
    %99 = vector.load %arg14[%c0_61, %c0_62] : memref<64x128xf32, #tpu.memory_space<vmem>>, vector<64x128xf32>
    tpu.vector_store %arg14[%c0_61, %c0_62], %98 {strides = array<i32>} : memref<64x128xf32, #tpu.memory_space<vmem>>, vector<64x128xf32>,
    return
  }
}

</mosaic_0001>

<llo_original>
// kernel: forward.1
$region0: #{forward.1}
  #allocation0 [shape = 'u32[]', space=smem, size = 0x4, offset = 0x4, fixed_abs, tag = 'smem constant byte address 0x4 - core index']
  #allocation1 [shape = 'u32[72,128]{1,0:T(1,128)}', space=vmem, size = 0x9000, scoped, tag = 'internal scratch']
  %s0 = inlined_call_operand.vmem [shape: f32[2], index: 0, kind: input, shape index: {}]
  %s1 = inlined_call_operand.vmem [shape: f32[64,128], index: 1, kind: input, shape index: {}]
  %s2 = inlined_call_operand.vmem [shape: f32[64,64], index: 2, kind: input, shape index: {}]
  %s3 = inlined_call_operand.vmem [shape: f32[64,2], index: 3, kind: input, shape index: {}]
  %s4 = inlined_call_operand.vmem [shape: f32[2,64], index: 4, kind: input, shape index: {}]
  %s5 = inlined_call_operand.vmem [shape: f32[2,128,128], index: 5, kind: input, shape index: {}]
  %s6 = inlined_call_operand.vmem [shape: f32[2,1,128], index: 6, kind: input, shape index: {}]
  %s7 = inlined_call_operand.vmem [shape: f32[2,128,128], index: 7, kind: input, shape index: {}]
  %s8 = inlined_call_operand.vmem [shape: f32[2,1,128], index: 8, kind: input, shape index: {}]
  %s9 = inlined_call_operand.vmem [shape: f32[1,128,128], index: 9, kind: input, shape index: {}]
  %s10 = inlined_call_operand.vmem [shape: f32[1,1,128], index: 10, kind: input, shape index: {}]
  %s11 = inlined_call_operand.vmem [shape: f32[1,128,128], index: 11, kind: input, shape index: {}]
  %s12 = inlined_call_operand.vmem [shape: f32[1,1,128], index: 12, kind: input, shape index: {}]
  %s13 = inlined_call_operand.vmem [shape: f32[1,128], index: 13, kind: input, shape index: {}]
  %s14 = inlined_call_operand.hbm [shape: f32[64,128], index: 14, kind: output, shape index: {}]
  %s15 = sld [smem:[#allocation0]]
  $region70: #{forward.1} parent=0
    _
  %s17 = ssub.s32 1, %s15
  %s18 = scalar_select 0, %s17, %s15
  $region1: #{forward.1} parent=0
    #allocation2 [shape = 'u8[512]{0}', space=smem, size = 0x200, scoped, tag = 'input window, operand 0, single buffered']
    #allocation3 [shape = 's32[1]{0}', space=sflag, size = 0x4, scoped, tag = 'scoped memory for forward.1']
    #allocation4 [shape = 's32[1]{0}', space=sflag, size = 0x4, scoped, tag = 'scoped memory for forward.1']
    #allocation5 [shape = 'u8[32768]{0}', space=vmem, size = 0x8000, scoped, tag = 'output window, operand 0, single buffered']
    %19 = vsyncpa [#allocation4], 0
    %20 = vsyncpa [#allocation3], 0
    // Predicated region
    $region2: #{forward.1} parent=1 // pred_check
      _
    $region3: #{forward.1} parent=1 // pred_check_branch
      %22 = sbr.rel (0) target = $region5
    $region4: #{forward.1} parent=1 // pred_region
      %24 = vsyncadd [#allocation4], 0
      %s26 = sshll.u32 %s0, 4
      %s27 = int_to_ptr.vmem [resolvable:$true] %s26
      %29 = dma.vmem_to_smem %s27, 16, [#allocation2], [#allocation4]
    $region5: #{forward.1} parent=1 // pred_fallthru
      _
    // Predicated region
    $region6: #{forward.1} parent=1 // pred_check
      _
    $region7: #{forward.1} parent=1 // pred_check_branch
      %31 = sbr.rel (0) target = $region9
    $region8: #{forward.1} parent=1 // pred_region
      _
    $region9: #{forward.1} parent=1 // pred_fallthru
      _
    // Predicated region
    $region10: #{forward.1} parent=1 // pred_check
      _
    $region11: #{forward.1} parent=1 // pred_check_branch
      %33 = sbr.rel (0) target = $region13
    $region12: #{forward.1} parent=1 // pred_region
      _
    $region13: #{forward.1} parent=1 // pred_fallthru
      _
    // Predicated region
    $region14: #{forward.1} parent=1 // pred_check
      _
    $region15: #{forward.1} parent=1 // pred_check_branch
      %35 = sbr.rel (0) target = $region17
    $region16: #{forward.1} parent=1 // pred_region
      _
    $region17: #{forward.1} parent=1 // pred_fallthru
      _
    // Predicated region
    $region18: #{forward.1} parent=1 // pred_check
      _
    $region19: #{forward.1} parent=1 // pred_check_branch
      %37 = sbr.rel (0) target = $region21
    $region20: #{forward.1} parent=1 // pred_region
      _
    $region21: #{forward.1} parent=1 // pred_fallthru
      _
    // Predicated region
    $region22: #{forward.1} parent=1 // pred_check
      _
    $region23: #{forward.1} parent=1 // pred_check_branch
      %39 = sbr.rel (0) target = $region25
    $region24: #{forward.1} parent=1 // pred_region
      _
    $region25: #{forward.1} parent=1 // pred_fallthru
      _
    // Predicated region
    $region26: #{forward.1} parent=1 // pred_check
      _
    $region27: #{forward.1} parent=1 // pred_check_branch
      %41 = sbr.rel (0) target = $region29
    $region28: #{forward.1} parent=1 // pred_region
      _
    $region29: #{forward.1} parent=1 // pred_fallthru
      _
    // Predicated region
    $region30: #{forward.1} parent=1 // pred_check
      _
    $region31: #{forward.1} parent=1 // pred_check_branch
      %43 = sbr.rel (0) target = $region33
    $region32: #{forward.1} parent=1 // pred_region
      _
    $region33: #{forward.1} parent=1 // pred_fallthru
      _
    // Predicated region
    $region34: #{forward.1} parent=1 // pred_check
      _
    $region35: #{forward.1} parent=1 // pred_check_branch
      %45 = sbr.rel (0) target = $region37
    $region36: #{forward.1} parent=1 // pred_region
      _
    $region37: #{forward.1} parent=1 // pred_fallthru
      _
    // Predicated region
    $region38: #{forward.1} parent=1 // pred_check
      _
    $region39: #{forward.1} parent=1 // pred_check_branch
      %47 = sbr.rel (0) target = $region41
    $region40: #{forward.1} parent=1 // pred_region
      _
    $region41: #{forward.1} parent=1 // pred_fallthru
      _
    // Predicated region
    $region42: #{forward.1} parent=1 // pred_check
      _
    $region43: #{forward.1} parent=1 // pred_check_branch
      %49 = sbr.rel (0) target = $region45
    $region44: #{forward.1} parent=1 // pred_region
      _
    $region45: #{forward.1} parent=1 // pred_fallthru
      _
    // Predicated region
    $region46: #{forward.1} parent=1 // pred_check
      _
    $region47: #{forward.1} parent=1 // pred_check_branch
      %51 = sbr.rel (0) target = $region49
    $region48: #{forward.1} parent=1 // pred_region
      _
    $region49: #{forward.1} parent=1 // pred_fallthru
      _
    // Predicated region
    $region50: #{forward.1} parent=1 // pred_check
      _
    $region51: #{forward.1} parent=1 // pred_check_branch
      %53 = sbr.rel (0) target = $region53
    $region52: #{forward.1} parent=1 // pred_region
      _
    $region53: #{forward.1} parent=1 // pred_fallthru
      _
    // Predicated region
    $region54: #{forward.1} parent=1 // pred_check
      _
    $region55: #{forward.1} parent=1 // pred_check_branch
      %55 = sbr.rel (0) target = $region57
    $region56: #{forward.1} parent=1 // pred_region
      _
    $region57: #{forward.1} parent=1 // pred_fallthru
      _
    // Predicated region
    $region58: #{forward.1} parent=1 // pred_check
      _
    $region59: #{forward.1} parent=1 // pred_check_branch
      %57 = sbr.rel (0) target = $region61
    $region60: #{forward.1} parent=1 // pred_region
      %59 = dma.done [#allocation4], 16
    $region61: #{forward.1} parent=1 // pred_fallthru
      _
    %60 = sfence
    %v61 = vld [vmem:[%s1] sm:$0xff]
    %v62 = vld [vmem:[%s1 + $0x8] sm:$0xff]
    %v63 = vld [vmem:[%s1 + $0x10] sm:$0xff]
    %v64 = vld [vmem:[%s1 + $0x18] sm:$0xff]
    %v65 = vld [vmem:[%s1 + $0x20] sm:$0xff]
    %v66 = vld [vmem:[%s1 + $0x28] sm:$0xff]
    %v67 = vld [vmem:[%s1 + $0x30] sm:$0xff]
    %v68 = vld [vmem:[%s1 + $0x38] sm:$0xff]
    %v69 = vld [vmem:[%s2] sm:$0xff]
    %v70 = vld [vmem:[%s2 + $0x8] sm:$0xff]
    %v71 = vld [vmem:[%s2 + $0x10] sm:$0xff]
    %v72 = vld [vmem:[%s2 + $0x18] sm:$0xff]
    %v73 = vld [vmem:[%s2 + $0x20] sm:$0xff]
    %v74 = vld [vmem:[%s2 + $0x28] sm:$0xff]
    %v75 = vld [vmem:[%s2 + $0x30] sm:$0xff]
    %v76 = vld [vmem:[%s2 + $0x38] sm:$0xff]
    %v77 = vld [vmem:[%s3] sm:$0xff]
    %v78 = vld [vmem:[%s3 + $0x8] sm:$0xff]
    %v79 = vld [vmem:[%s3 + $0x10] sm:$0xff]
    %v80 = vld [vmem:[%s3 + $0x18] sm:$0xff]
    %v81 = vld [vmem:[%s3 + $0x20] sm:$0xff]
    %v82 = vld [vmem:[%s3 + $0x28] sm:$0xff]
    %v83 = vld [vmem:[%s3 + $0x30] sm:$0xff]
    %v84 = vld [vmem:[%s3 + $0x38] sm:$0xff]
    %v85 = vld [vmem:[%s4] sm:$0x3]
    %v86 = vld [vmem:[%s13] sm:$0x1]
    %v88 = vperm.slane %v86, 0
    %91 = vset.pattern.permute.xlu0 0
    %92 = vperm.xlu0 %91, %v77
    %v93 = vpop.permute.xlu0 %92
    %96 = vset.pattern.permute.xlu0 0
    %97 = vperm.xlu0 %96, %v78
    %v98 = vpop.permute.xlu0 %97
    %101 = vset.pattern.permute.xlu0 0
    %102 = vperm.xlu0 %101, %v79
    %v103 = vpop.permute.xlu0 %102
    %106 = vset.pattern.permute.xlu0 0
    %107 = vperm.xlu0 %106, %v80
    %v108 = vpop.permute.xlu0 %107
    %111 = vset.pattern.permute.xlu0 0
    %112 = vperm.xlu0 %111, %v81
    %v113 = vpop.permute.xlu0 %112
    %116 = vset.pattern.permute.xlu0 0
    %117 = vperm.xlu0 %116, %v82
    %v118 = vpop.permute.xlu0 %117
    %121 = vset.pattern.permute.xlu0 0
    %122 = vperm.xlu0 %121, %v83
    %v123 = vpop.permute.xlu0 %122
    %126 = vset.pattern.permute.xlu0 0
    %127 = vperm.xlu0 %126, %v84
    %v128 = vpop.permute.xlu0 %127
    %v130 = vmul.f32 %v93, %v88
    %v131 = vmul.f32 %v98, %v88
    %v132 = vmul.f32 %v103, %v88
    %v133 = vmul.f32 %v108, %v88
    %v134 = vmul.f32 %v113, %v88
    %v135 = vmul.f32 %v118, %v88
    %v136 = vmul.f32 %v123, %v88
    %v137 = vmul.f32 %v128, %v88
    %138 = vset.pattern.permute.xlu0 1
    %139 = vperm.xlu0 %138, %v77
    %v140 = vpop.permute.xlu0 %139
    %142 = vset.pattern.permute.xlu0 1
    %143 = vperm.xlu0 %142, %v78
    %v144 = vpop.permute.xlu0 %143
    %146 = vset.pattern.permute.xlu0 1
    %147 = vperm.xlu0 %146, %v79
    %v148 = vpop.permute.xlu0 %147
    %150 = vset.pattern.permute.xlu0 1
    %151 = vperm.xlu0 %150, %v80
    %v152 = vpop.permute.xlu0 %151
    %154 = vset.pattern.permute.xlu0 1
    %155 = vperm.xlu0 %154, %v81
    %v156 = vpop.permute.xlu0 %155
    %158 = vset.pattern.permute.xlu0 1
    %159 = vperm.xlu0 %158, %v82
    %v160 = vpop.permute.xlu0 %159
    %162 = vset.pattern.permute.xlu0 1
    %163 = vperm.xlu0 %162, %v83
    %v164 = vpop.permute.xlu0 %163
    %166 = vset.pattern.permute.xlu0 1
    %167 = vperm.xlu0 %166, %v84
    %v168 = vpop.permute.xlu0 %167
    %v170 = vmul.f32 %v140, %v88
    %v171 = vmul.f32 %v144, %v88
    %v172 = vmul.f32 %v148, %v88
    %v173 = vmul.f32 %v152, %v88
    %v174 = vmul.f32 %v156, %v88
    %v175 = vmul.f32 %v160, %v88
    %v176 = vmul.f32 %v164, %v88
    %v177 = vmul.f32 %v168, %v88
    %v178 = vadd.f32 %v130, %v170
    %v179 = vadd.f32 %v131, %v171
    %v180 = vadd.f32 %v132, %v172
    %v181 = vadd.f32 %v133, %v173
    %v182 = vadd.f32 %v134, %v174
    %v183 = vadd.f32 %v135, %v175
    %v184 = vadd.f32 %v136, %v176
    %v185 = vadd.f32 %v137, %v177
    %v186 = vadd.f32 %v61, %v178
    %v187 = vadd.f32 %v62, %v179
    %v188 = vadd.f32 %v63, %v180
    %v189 = vadd.f32 %v64, %v181
    %v190 = vadd.f32 %v65, %v182
    %v191 = vadd.f32 %v66, %v183
    %v192 = vadd.f32 %v67, %v184
    %v193 = vadd.f32 %v68, %v185
    %v194 = vmax.f32 %v186, 0.0
    %v195 = vmax.f32 %v187, 0.0
    %v196 = vmax.f32 %v188, 0.0
    %v197 = vmax.f32 %v189, 0.0
    %v198 = vmax.f32 %v190, 0.0
    %v199 = vmax.f32 %v191, 0.0
    %v200 = vmax.f32 %v192, 0.0
    %v201 = vmax.f32 %v193, 0.0
    %vm202 = vcmask 523264
    %v204 = vsel %vm202, %v69, 0
    %v207 = vsel %vm202, %v70, 0
    %v210 = vsel %vm202, %v71, 0
    %v213 = vsel %vm202, %v72, 0
    %v216 = vsel %vm202, %v73, 0
    %v219 = vsel %vm202, %v74, 0
    %v222 = vsel %vm202, %v75, 0
    %v225 = vsel %vm202, %v76, 0
    %227 = vmatpush.msra.mxu0 0.0
    %228 = vmatpush.msra.mxu0 0.0
    %229 = vmatpush.msra.mxu0 0.0
    %230 = vmatpush.msra.mxu0 0.0
    %231 = vmatpush.msra.mxu0 0.0
    %232 = vmatpush.msra.mxu0 0.0
    %233 = vmatpush.msra.mxu0 0.0
    %234 = vmatpush.msra.mxu0 0.0
    %235 = vmatpush.msra.mxu0 %v201
    %236 = vmatpush.msra.mxu0 %v200
    %237 = vmatpush.msra.mxu0 %v199
    %238 = vmatpush.msra.mxu0 %v198
    %239 = vmatpush.msra.mxu0 %v197
    %240 = vmatpush.msra.mxu0 %v196
    %241 = vmatpush.msra.mxu0 %v195
    %242 = vmatpush.msra.mxu0 %v194
    %243 = vmatmul.f32.gmra.mxu0 %v204
    %v244 = vpop.f32.mrf.mxu0
    %v245 = vadd.f32 0.0, %v244
    %246 = vmatmul.f32.gmra.mxu0 %v207
    %v247 = vpop.f32.mrf.mxu0
    %v248 = vadd.f32 0.0, %v247
    %249 = vmatmul.f32.gmra.mxu0 %v210
    %v250 = vpop.f32.mrf.mxu0
    %v251 = vadd.f32 0.0, %v250
    %252 = vmatmul.f32.gmra.mxu0 %v213
    %v253 = vpop.f32.mrf.mxu0
    %v254 = vadd.f32 0.0, %v253
    %255 = vmatmul.f32.gmra.mxu0 %v216
    %v256 = vpop.f32.mrf.mxu0
    %v257 = vadd.f32 0.0, %v256
    %258 = vmatmul.f32.gmra.mxu0 %v219
    %v259 = vpop.f32.mrf.mxu0
    %v260 = vadd.f32 0.0, %v259
    %261 = vmatmul.f32.gmra.mxu0 %v222
    %v262 = vpop.f32.mrf.mxu0
    %v263 = vadd.f32 0.0, %v262
    %264 = vmatmul.f32.gmra.mxu0 %v225
    %v265 = vpop.f32.mrf.mxu0
    %v266 = vadd.f32 0.0, %v265
    %267 = vdwg.mxu0
    %s268 = sld [smem:[#allocation2]]
    %v269 = vstv %s268
    %v270 = vmul.f32 %v269, %v186
    %v271 = vmul.f32 %v269, %v187
    %v272 = vmul.f32 %v269, %v188
    %v273 = vmul.f32 %v269, %v189
    %v274 = vmul.f32 %v269, %v190
    %v275 = vmul.f32 %v269, %v191
    %v276 = vmul.f32 %v269, %v192
    %v277 = vmul.f32 %v269, %v193
    %v278 = vadd.f32 %v270, %v245
    %v279 = vadd.f32 %v271, %v248
    %v280 = vadd.f32 %v272, %v251
    %v281 = vadd.f32 %v273, %v254
    %v282 = vadd.f32 %v274, %v257
    %v283 = vadd.f32 %v275, %v260
    %v284 = vadd.f32 %v276, %v263
    %v285 = vadd.f32 %v277, %v266
    %v286 = vld [vmem:[%s5] sm:$0xff]
    %v287 = vld [vmem:[%s5 + $0x8] sm:$0xff]
    %v288 = vld [vmem:[%s5 + $0x10] sm:$0xff]
    %v289 = vld [vmem:[%s5 + $0x18] sm:$0xff]
    %v290 = vld [vmem:[%s5 + $0x20] sm:$0xff]
    %v291 = vld [vmem:[%s5 + $0x28] sm:$0xff]
    %v292 = vld [vmem:[%s5 + $0x30] sm:$0xff]
    %v293 = vld [vmem:[%s5 + $0x38] sm:$0xff]
    %v294 = vld [vmem:[%s5 + $0x40] sm:$0xff]
    %v295 = vld [vmem:[%s5 + $0x48] sm:$0xff]
    %v296 = vld [vmem:[%s5 + $0x50] sm:$0xff]
    %v297 = vld [vmem:[%s5 + $0x58] sm:$0xff]
    %v298 = vld [vmem:[%s5 + $0x60] sm:$0xff]
    %v299 = vld [vmem:[%s5 + $0x68] sm:$0xff]
    %v300 = vld [vmem:[%s5 + $0x70] sm:$0xff]
    %v301 = vld [vmem:[%s5 + $0x78] sm:$0xff]
    %v302 = vld [vmem:[%s6] sm:$0x1]
    %v304 = vperm.slane %v302, 0
    %306 = vmatpush.msra.mxu0 %v301
    %307 = vmatpush.msra.mxu0 %v300
    %308 = vmatpush.msra.mxu0 %v299
    %309 = vmatpush.msra.mxu0 %v298
    %310 = vmatpush.msra.mxu0 %v297
    %311 = vmatpush.msra.mxu0 %v296
    %312 = vmatpush.msra.mxu0 %v295
    %313 = vmatpush.msra.mxu0 %v294
    %314 = vmatpush.msra.mxu0 %v293
    %315 = vmatpush.msra.mxu0 %v292
    %316 = vmatpush.msra.mxu0 %v291
    %317 = vmatpush.msra.mxu0 %v290
    %318 = vmatpush.msra.mxu0 %v289
    %319 = vmatpush.msra.mxu0 %v288
    %320 = vmatpush.msra.mxu0 %v287
    %321 = vmatpush.msra.mxu0 %v286
    %322 = vmatmul.f32.gmra.mxu0 %v278
    %v323 = vpop.f32.mrf.mxu0
    %v324 = vadd.f32 %v304, %v323
    %325 = vmatmul.f32.gmra.mxu0 %v279
    %v326 = vpop.f32.mrf.mxu0
    %v327 = vadd.f32 %v304, %v326
    %328 = vmatmul.f32.gmra.mxu0 %v280
    %v329 = vpop.f32.mrf.mxu0
    %v330 = vadd.f32 %v304, %v329
    %331 = vmatmul.f32.gmra.mxu0 %v281
    %v332 = vpop.f32.mrf.mxu0
    %v333 = vadd.f32 %v304, %v332
    %334 = vmatmul.f32.gmra.mxu0 %v282
    %v335 = vpop.f32.mrf.mxu0
    %v336 = vadd.f32 %v304, %v335
    %337 = vmatmul.f32.gmra.mxu0 %v283
    %v338 = vpop.f32.mrf.mxu0
    %v339 = vadd.f32 %v304, %v338
    %340 = vmatmul.f32.gmra.mxu0 %v284
    %v341 = vpop.f32.mrf.mxu0
    %v342 = vadd.f32 %v304, %v341
    %343 = vmatmul.f32.gmra.mxu0 %v285
    %v344 = vpop.f32.mrf.mxu0
    %v345 = vadd.f32 %v304, %v344
    %346 = vdwg.mxu0
    %v347 = vmax.f32 %v324, 0.0
    %v348 = vmax.f32 %v327, 0.0
    %v349 = vmax.f32 %v330, 0.0
    %v350 = vmax.f32 %v333, 0.0
    %v351 = vmax.f32 %v336, 0.0
    %v352 = vmax.f32 %v339, 0.0
    %v353 = vmax.f32 %v342, 0.0
    %v354 = vmax.f32 %v345, 0.0
    %v355 = vld [vmem:[%s7] sm:$0xff]
    %v356 = vld [vmem:[%s7 + $0x8] sm:$0xff]
    %v357 = vld [vmem:[%s7 + $0x10] sm:$0xff]
    %v358 = vld [vmem:[%s7 + $0x18] sm:$0xff]
    %v359 = vld [vmem:[%s7 + $0x20] sm:$0xff]
    %v360 = vld [vmem:[%s7 + $0x28] sm:$0xff]
    %v361 = vld [vmem:[%s7 + $0x30] sm:$0xff]
    %v362 = vld [vmem:[%s7 + $0x38] sm:$0xff]
    %v363 = vld [vmem:[%s7 + $0x40] sm:$0xff]
    %v364 = vld [vmem:[%s7 + $0x48] sm:$0xff]
    %v365 = vld [vmem:[%s7 + $0x50] sm:$0xff]
    %v366 = vld [vmem:[%s7 + $0x58] sm:$0xff]
    %v367 = vld [vmem:[%s7 + $0x60] sm:$0xff]
    %v368 = vld [vmem:[%s7 + $0x68] sm:$0xff]
    %v369 = vld [vmem:[%s7 + $0x70] sm:$0xff]
    %v370 = vld [vmem:[%s7 + $0x78] sm:$0xff]
    %v371 = vld [vmem:[%s8] sm:$0x1]
    %v373 = vperm.slane %v371, 0
    %375 = vmatpush.msra.mxu0 %v370
    %376 = vmatpush.msra.mxu0 %v369
    %377 = vmatpush.msra.mxu0 %v368
    %378 = vmatpush.msra.mxu0 %v367
    %379 = vmatpush.msra.mxu0 %v366
    %380 = vmatpush.msra.mxu0 %v365
    %381 = vmatpush.msra.mxu0 %v364
    %382 = vmatpush.msra.mxu0 %v363
    %383 = vmatpush.msra.mxu0 %v362
    %384 = vmatpush.msra.mxu0 %v361
    %385 = vmatpush.msra.mxu0 %v360
    %386 = vmatpush.msra.mxu0 %v359
    %387 = vmatpush.msra.mxu0 %v358
    %388 = vmatpush.msra.mxu0 %v357
    %389 = vmatpush.msra.mxu0 %v356
    %390 = vmatpush.msra.mxu0 %v355
    %391 = vmatmul.f32.gmra.mxu0 %v347
    %v392 = vpop.f32.mrf.mxu0
    %v393 = vadd.f32 %v373, %v392
    %394 = vmatmul.f32.gmra.mxu0 %v348
    %v395 = vpop.f32.mrf.mxu0
    %v396 = vadd.f32 %v373, %v395
    %397 = vmatmul.f32.gmra.mxu0 %v349
    %v398 = vpop.f32.mrf.mxu0
    %v399 = vadd.f32 %v373, %v398
    %400 = vmatmul.f32.gmra.mxu0 %v350
    %v401 = vpop.f32.mrf.mxu0
    %v402 = vadd.f32 %v373, %v401
    %403 = vmatmul.f32.gmra.mxu0 %v351
    %v404 = vpop.f32.mrf.mxu0
    %v405 = vadd.f32 %v373, %v404
    %406 = vmatmul.f32.gmra.mxu0 %v352
    %v407 = vpop.f32.mrf.mxu0
    %v408 = vadd.f32 %v373, %v407
    %409 = vmatmul.f32.gmra.mxu0 %v353
    %v410 = vpop.f32.mrf.mxu0
    %v411 = vadd.f32 %v373, %v410
    %412 = vmatmul.f32.gmra.mxu0 %v354
    %v413 = vpop.f32.mrf.mxu0
    %v414 = vadd.f32 %v373, %v413
    %415 = vdwg.mxu0
    %v416 = vmax.f32 %v393, 0.0
    %v417 = vmax.f32 %v396, 0.0
    %v418 = vmax.f32 %v399, 0.0
    %v419 = vmax.f32 %v402, 0.0
    %v420 = vmax.f32 %v405, 0.0
    %v421 = vmax.f32 %v408, 0.0
    %v422 = vmax.f32 %v411, 0.0
    %v423 = vmax.f32 %v414, 0.0
    %v425 = vsel %vm202, %v85, 0
    %427 = vmatpush.msra.mxu0 0.0
    %428 = vmatpush.msra.mxu0 0.0
    %429 = vmatpush.msra.mxu0 0.0
    %430 = vmatpush.msra.mxu0 0.0
    %431 = vmatpush.msra.mxu0 0.0
    %432 = vmatpush.msra.mxu0 0.0
    %433 = vmatpush.msra.mxu0 0.0
    %434 = vmatpush.msra.mxu0 0.0
    %435 = vmatpush.msra.mxu0 %v193
    %436 = vmatpush.msra.mxu0 %v192
    %437 = vmatpush.msra.mxu0 %v191
    %438 = vmatpush.msra.mxu0 %v190
    %439 = vmatpush.msra.mxu0 %v189
    %440 = vmatpush.msra.mxu0 %v188
    %441 = vmatpush.msra.mxu0 %v187
    %442 = vmatpush.msra.mxu0 %v186
    %443 = vmatmul.f32.gmra.mxu0 %v425
    %v444 = vpop.f32.mrf.mxu0
    %v445 = vadd.f32 %v88, %v444
    %446 = vdwg.mxu0
    %v447 = vld [vmem:[%s9] sm:$0xff]
    %v448 = vld [vmem:[%s9 + $0x8] sm:$0xff]
    %v449 = vld [vmem:[%s9 + $0x10] sm:$0xff]
    %v450 = vld [vmem:[%s9 + $0x18] sm:$0xff]
    %v451 = vld [vmem:[%s9 + $0x20] sm:$0xff]
    %v452 = vld [vmem:[%s9 + $0x28] sm:$0xff]
    %v453 = vld [vmem:[%s9 + $0x30] sm:$0xff]
    %v454 = vld [vmem:[%s9 + $0x38] sm:$0xff]
    %v455 = vld [vmem:[%s9 + $0x40] sm:$0xff]
    %v456 = vld [vmem:[%s9 + $0x48] sm:$0xff]
    %v457 = vld [vmem:[%s9 + $0x50] sm:$0xff]
    %v458 = vld [vmem:[%s9 + $0x58] sm:$0xff]
    %v459 = vld [vmem:[%s9 + $0x60] sm:$0xff]
    %v460 = vld [vmem:[%s9 + $0x68] sm:$0xff]
    %v461 = vld [vmem:[%s9 + $0x70] sm:$0xff]
    %v462 = vld [vmem:[%s9 + $0x78] sm:$0xff]
    %v463 = vld [vmem:[%s10] sm:$0x1]
    %v465 = vperm.slane %v463, 0
    %467 = vmatpush.msra.mxu0 %v462
    %468 = vmatpush.msra.mxu0 %v461
    %469 = vmatpush.msra.mxu0 %v460
    %470 = vmatpush.msra.mxu0 %v459
    %471 = vmatpush.msra.mxu0 %v458
    %472 = vmatpush.msra.mxu0 %v457
    %473 = vmatpush.msra.mxu0 %v456
    %474 = vmatpush.msra.mxu0 %v455
    %475 = vmatpush.msra.mxu0 %v454
    %476 = vmatpush.msra.mxu0 %v453
    %477 = vmatpush.msra.mxu0 %v452
    %478 = vmatpush.msra.mxu0 %v451
    %479 = vmatpush.msra.mxu0 %v450
    %480 = vmatpush.msra.mxu0 %v449
    %481 = vmatpush.msra.mxu0 %v448
    %482 = vmatpush.msra.mxu0 %v447
    %483 = vmatmul.f32.gmra.mxu0 %v445
    %v484 = vpop.f32.mrf.mxu0
    %v485 = vadd.f32 %v465, %v484
    %486 = vdwg.mxu0
    %v487 = vmax.f32 %v485, 0.0
    %v488 = vld [vmem:[%s11] sm:$0xff]
    %v489 = vld [vmem:[%s11 + $0x8] sm:$0xff]
    %v490 = vld [vmem:[%s11 + $0x10] sm:$0xff]
    %v491 = vld [vmem:[%s11 + $0x18] sm:$0xff]
    %v492 = vld [vmem:[%s11 + $0x20] sm:$0xff]
    %v493 = vld [vmem:[%s11 + $0x28] sm:$0xff]
    %v494 = vld [vmem:[%s11 + $0x30] sm:$0xff]
    %v495 = vld [vmem:[%s11 + $0x38] sm:$0xff]
    %v496 = vld [vmem:[%s11 + $0x40] sm:$0xff]
    %v497 = vld [vmem:[%s11 + $0x48] sm:$0xff]
    %v498 = vld [vmem:[%s11 + $0x50] sm:$0xff]
    %v499 = vld [vmem:[%s11 + $0x58] sm:$0xff]
    %v500 = vld [vmem:[%s11 + $0x60] sm:$0xff]
    %v501 = vld [vmem:[%s11 + $0x68] sm:$0xff]
    %v502 = vld [vmem:[%s11 + $0x70] sm:$0xff]
    %v503 = vld [vmem:[%s11 + $0x78] sm:$0xff]
    %v504 = vld [vmem:[%s12] sm:$0x1]
    %v506 = vperm.slane %v504, 0
    %508 = vmatpush.msra.mxu0 %v503
    %509 = vmatpush.msra.mxu0 %v502
    %510 = vmatpush.msra.mxu0 %v501
    %511 = vmatpush.msra.mxu0 %v500
    %512 = vmatpush.msra.mxu0 %v499
    %513 = vmatpush.msra.mxu0 %v498
    %514 = vmatpush.msra.mxu0 %v497
    %515 = vmatpush.msra.mxu0 %v496
    %516 = vmatpush.msra.mxu0 %v495
    %517 = vmatpush.msra.mxu0 %v494
    %518 = vmatpush.msra.mxu0 %v493
    %519 = vmatpush.msra.mxu0 %v492
    %520 = vmatpush.msra.mxu0 %v491
    %521 = vmatpush.msra.mxu0 %v490
    %522 = vmatpush.msra.mxu0 %v489
    %523 = vmatpush.msra.mxu0 %v488
    %524 = vmatmul.f32.gmra.mxu0 %v487
    %v525 = vpop.f32.mrf.mxu0
    %v526 = vadd.f32 %v506, %v525
    %527 = vdwg.mxu0
    %v528 = vmax.f32 %v526, 0.0
    %v529 = vperm.slane %v528, 0
    %v530 = vmul.f32 %v93, %v529
    %v531 = vmul.f32 %v98, %v529
    %v532 = vmul.f32 %v103, %v529
    %v533 = vmul.f32 %v108, %v529
    %v534 = vmul.f32 %v113, %v529
    %v535 = vmul.f32 %v118, %v529
    %v536 = vmul.f32 %v123, %v529
    %v537 = vmul.f32 %v128, %v529
    %v538 = vperm.slane %v528, 1
    %v539 = vmul.f32 %v140, %v538
    %v540 = vmul.f32 %v144, %v538
    %v541 = vmul.f32 %v148, %v538
    %v542 = vmul.f32 %v152, %v538
    %v543 = vmul.f32 %v156, %v538
    %v544 = vmul.f32 %v160, %v538
    %v545 = vmul.f32 %v164, %v538
    %v546 = vmul.f32 %v168, %v538
    %v547 = vadd.f32 %v530, %v539
    %v548 = vadd.f32 %v531, %v540
    %v549 = vadd.f32 %v532, %v541
    %v550 = vadd.f32 %v533, %v542
    %v551 = vadd.f32 %v534, %v543
    %v552 = vadd.f32 %v535, %v544
    %v553 = vadd.f32 %v536, %v545
    %v554 = vadd.f32 %v537, %v546
    %v555 = vadd.f32 %v416, %v547
    %v556 = vadd.f32 %v417, %v548
    %v557 = vadd.f32 %v418, %v549
    %v558 = vadd.f32 %v419, %v550
    %v559 = vadd.f32 %v420, %v551
    %v560 = vadd.f32 %v421, %v552
    %v561 = vadd.f32 %v422, %v553
    %v562 = vadd.f32 %v423, %v554
    %v563 = vmax.f32 %v555, 0.0
    %v564 = vmax.f32 %v556, 0.0
    %v565 = vmax.f32 %v557, 0.0
    %v566 = vmax.f32 %v558, 0.0
    %v567 = vmax.f32 %v559, 0.0
    %v568 = vmax.f32 %v560, 0.0
    %v569 = vmax.f32 %v561, 0.0
    %v570 = vmax.f32 %v562, 0.0
    %571 = vmatpush.msra.mxu0 0.0
    %572 = vmatpush.msra.mxu0 0.0
    %573 = vmatpush.msra.mxu0 0.0
    %574 = vmatpush.msra.mxu0 0.0
    %575 = vmatpush.msra.mxu0 0.0
    %576 = vmatpush.msra.mxu0 0.0
    %577 = vmatpush.msra.mxu0 0.0
    %578 = vmatpush.msra.mxu0 0.0
    %579 = vmatpush.msra.mxu0 %v570
    %580 = vmatpush.msra.mxu0 %v569
    %581 = vmatpush.msra.mxu0 %v568
    %582 = vmatpush.msra.mxu0 %v567
    %583 = vmatpush.msra.mxu0 %v566
    %584 = vmatpush.msra.mxu0 %v565
    %585 = vmatpush.msra.mxu0 %v564
    %586 = vmatpush.msra.mxu0 %v563
    %587 = vmatmul.f32.gmra.mxu0 %v204
    %v588 = vpop.f32.mrf.mxu0
    %v589 = vadd.f32 0.0, %v588
    %590 = vmatmul.f32.gmra.mxu0 %v207
    %v591 = vpop.f32.mrf.mxu0
    %v592 = vadd.f32 0.0, %v591
    %593 = vmatmul.f32.gmra.mxu0 %v210
    %v594 = vpop.f32.mrf.mxu0
    %v595 = vadd.f32 0.0, %v594
    %596 = vmatmul.f32.gmra.mxu0 %v213
    %v597 = vpop.f32.mrf.mxu0
    %v598 = vadd.f32 0.0, %v597
    %599 = vmatmul.f32.gmra.mxu0 %v216
    %v600 = vpop.f32.mrf.mxu0
    %v601 = vadd.f32 0.0, %v600
    %602 = vmatmul.f32.gmra.mxu0 %v219
    %v603 = vpop.f32.mrf.mxu0
    %v604 = vadd.f32 0.0, %v603
    %605 = vmatmul.f32.gmra.mxu0 %v222
    %v606 = vpop.f32.mrf.mxu0
    %v607 = vadd.f32 0.0, %v606
    %608 = vmatmul.f32.gmra.mxu0 %v225
    %v609 = vpop.f32.mrf.mxu0
    %v610 = vadd.f32 0.0, %v609
    %611 = vdwg.mxu0
    %s612 = sld [smem:[#allocation2 + $0x1]]
    %v613 = vstv %s612
    %v614 = vmul.f32 %v613, %v555
    %v615 = vmul.f32 %v613, %v556
    %v616 = vmul.f32 %v613, %v557
    %v617 = vmul.f32 %v613, %v558
    %v618 = vmul.f32 %v613, %v559
    %v619 = vmul.f32 %v613, %v560
    %v620 = vmul.f32 %v613, %v561
    %v621 = vmul.f32 %v613, %v562
    %v622 = vadd.f32 %v614, %v589
    %v623 = vadd.f32 %v615, %v592
    %v624 = vadd.f32 %v616, %v595
    %v625 = vadd.f32 %v617, %v598
    %v626 = vadd.f32 %v618, %v601
    %v627 = vadd.f32 %v619, %v604
    %v628 = vadd.f32 %v620, %v607
    %v629 = vadd.f32 %v621, %v610
    %s630 = scalar_lea.vmem %s5, 128
    %v631 = vld [vmem:[%s630] sm:$0xff]
    %v632 = vld [vmem:[%s630 + $0x8] sm:$0xff]
    %v633 = vld [vmem:[%s630 + $0x10] sm:$0xff]
    %v634 = vld [vmem:[%s630 + $0x18] sm:$0xff]
    %v635 = vld [vmem:[%s630 + $0x20] sm:$0xff]
    %v636 = vld [vmem:[%s630 + $0x28] sm:$0xff]
    %v637 = vld [vmem:[%s630 + $0x30] sm:$0xff]
    %v638 = vld [vmem:[%s630 + $0x38] sm:$0xff]
    %v639 = vld [vmem:[%s630 + $0x40] sm:$0xff]
    %v640 = vld [vmem:[%s630 + $0x48] sm:$0xff]
    %v641 = vld [vmem:[%s630 + $0x50] sm:$0xff]
    %v642 = vld [vmem:[%s630 + $0x58] sm:$0xff]
    %v643 = vld [vmem:[%s630 + $0x60] sm:$0xff]
    %v644 = vld [vmem:[%s630 + $0x68] sm:$0xff]
    %v645 = vld [vmem:[%s630 + $0x70] sm:$0xff]
    %v646 = vld [vmem:[%s630 + $0x78] sm:$0xff]
    %s647 = scalar_lea.vmem %s6, 1
    %v648 = vld [vmem:[%s647] sm:$0x1]
    %v650 = vperm.slane %v648, 0
    %652 = vmatpush.msra.mxu0 %v646
    %653 = vmatpush.msra.mxu0 %v645
    %654 = vmatpush.msra.mxu0 %v644
    %655 = vmatpush.msra.mxu0 %v643
    %656 = vmatpush.msra.mxu0 %v642
    %657 = vmatpush.msra.mxu0 %v641
    %658 = vmatpush.msra.mxu0 %v640
    %659 = vmatpush.msra.mxu0 %v639
    %660 = vmatpush.msra.mxu0 %v638
    %661 = vmatpush.msra.mxu0 %v637
    %662 = vmatpush.msra.mxu0 %v636
    %663 = vmatpush.msra.mxu0 %v635
    %664 = vmatpush.msra.mxu0 %v634
    %665 = vmatpush.msra.mxu0 %v633
    %666 = vmatpush.msra.mxu0 %v632
    %667 = vmatpush.msra.mxu0 %v631
    %668 = vmatmul.f32.gmra.mxu0 %v622
    %v669 = vpop.f32.mrf.mxu0
    %v670 = vadd.f32 %v650, %v669
    %671 = vmatmul.f32.gmra.mxu0 %v623
    %v672 = vpop.f32.mrf.mxu0
    %v673 = vadd.f32 %v650, %v672
    %674 = vmatmul.f32.gmra.mxu0 %v624
    %v675 = vpop.f32.mrf.mxu0
    %v676 = vadd.f32 %v650, %v675
    %677 = vmatmul.f32.gmra.mxu0 %v625
    %v678 = vpop.f32.mrf.mxu0
    %v679 = vadd.f32 %v650, %v678
    %680 = vmatmul.f32.gmra.mxu0 %v626
    %v681 = vpop.f32.mrf.mxu0
    %v682 = vadd.f32 %v650, %v681
    %683 = vmatmul.f32.gmra.mxu0 %v627
    %v684 = vpop.f32.mrf.mxu0
    %v685 = vadd.f32 %v650, %v684
    %686 = vmatmul.f32.gmra.mxu0 %v628
    %v687 = vpop.f32.mrf.mxu0
    %v688 = vadd.f32 %v650, %v687
    %689 = vmatmul.f32.gmra.mxu0 %v629
    %v690 = vpop.f32.mrf.mxu0
    %v691 = vadd.f32 %v650, %v690
    %692 = vdwg.mxu0
    %v693 = vmax.f32 %v670, 0.0
    %v694 = vmax.f32 %v673, 0.0
    %v695 = vmax.f32 %v676, 0.0
    %v696 = vmax.f32 %v679, 0.0
    %v697 = vmax.f32 %v682, 0.0
    %v698 = vmax.f32 %v685, 0.0
    %v699 = vmax.f32 %v688, 0.0
    %v700 = vmax.f32 %v691, 0.0
    %s701 = scalar_lea.vmem %s7, 128
    %v702 = vld [vmem:[%s701] sm:$0xff]
    %v703 = vld [vmem:[%s701 + $0x8] sm:$0xff]
    %v704 = vld [vmem:[%s701 + $0x10] sm:$0xff]
    %v705 = vld [vmem:[%s701 + $0x18] sm:$0xff]
    %v706 = vld [vmem:[%s701 + $0x20] sm:$0xff]
    %v707 = vld [vmem:[%s701 + $0x28] sm:$0xff]
    %v708 = vld [vmem:[%s701 + $0x30] sm:$0xff]
    %v709 = vld [vmem:[%s701 + $0x38] sm:$0xff]
    %v710 = vld [vmem:[%s701 + $0x40] sm:$0xff]
    %v711 = vld [vmem:[%s701 + $0x48] sm:$0xff]
    %v712 = vld [vmem:[%s701 + $0x50] sm:$0xff]
    %v713 = vld [vmem:[%s701 + $0x58] sm:$0xff]
    %v714 = vld [vmem:[%s701 + $0x60] sm:$0xff]
    %v715 = vld [vmem:[%s701 + $0x68] sm:$0xff]
    %v716 = vld [vmem:[%s701 + $0x70] sm:$0xff]
    %v717 = vld [vmem:[%s701 + $0x78] sm:$0xff]
    %s718 = scalar_lea.vmem %s8, 1
    %v719 = vld [vmem:[%s718] sm:$0x1]
    %v721 = vperm.slane %v719, 0
    %723 = vmatpush.msra.mxu0 %v717
    %724 = vmatpush.msra.mxu0 %v716
    %725 = vmatpush.msra.mxu0 %v715
    %726 = vmatpush.msra.mxu0 %v714
    %727 = vmatpush.msra.mxu0 %v713
    %728 = vmatpush.msra.mxu0 %v712
    %729 = vmatpush.msra.mxu0 %v711
    %730 = vmatpush.msra.mxu0 %v710
    %731 = vmatpush.msra.mxu0 %v709
    %732 = vmatpush.msra.mxu0 %v708
    %733 = vmatpush.msra.mxu0 %v707
    %734 = vmatpush.msra.mxu0 %v706
    %735 = vmatpush.msra.mxu0 %v705
    %736 = vmatpush.msra.mxu0 %v704
    %737 = vmatpush.msra.mxu0 %v703
    %738 = vmatpush.msra.mxu0 %v702
    %739 = vmatmul.f32.gmra.mxu0 %v693
    %v740 = vpop.f32.mrf.mxu0
    %v741 = vadd.f32 %v721, %v740
    %742 = vmatmul.f32.gmra.mxu0 %v694
    %v743 = vpop.f32.mrf.mxu0
    %v744 = vadd.f32 %v721, %v743
    %745 = vmatmul.f32.gmra.mxu0 %v695
    %v746 = vpop.f32.mrf.mxu0
    %v747 = vadd.f32 %v721, %v746
    %748 = vmatmul.f32.gmra.mxu0 %v696
    %v749 = vpop.f32.mrf.mxu0
    %v750 = vadd.f32 %v721, %v749
    %751 = vmatmul.f32.gmra.mxu0 %v697
    %v752 = vpop.f32.mrf.mxu0
    %v753 = vadd.f32 %v721, %v752
    %754 = vmatmul.f32.gmra.mxu0 %v698
    %v755 = vpop.f32.mrf.mxu0
    %v756 = vadd.f32 %v721, %v755
    %757 = vmatmul.f32.gmra.mxu0 %v699
    %v758 = vpop.f32.mrf.mxu0
    %v759 = vadd.f32 %v721, %v758
    %760 = vmatmul.f32.gmra.mxu0 %v700
    %v761 = vpop.f32.mrf.mxu0
    %v762 = vadd.f32 %v721, %v761
    %763 = vdwg.mxu0
    %764 = vst [vmem:[#allocation5] sm:$0xff] %v741
    %765 = vst [vmem:[#allocation5 + $0x8] sm:$0xff] %v744
    %766 = vst [vmem:[#allocation5 + $0x10] sm:$0xff] %v747
    %767 = vst [vmem:[#allocation5 + $0x18] sm:$0xff] %v750
    %768 = vst [vmem:[#allocation5 + $0x20] sm:$0xff] %v753
    %769 = vst [vmem:[#allocation5 + $0x28] sm:$0xff] %v756
    %770 = vst [vmem:[#allocation5 + $0x30] sm:$0xff] %v759
    %771 = vst [vmem:[#allocation5 + $0x38] sm:$0xff] %v762
    // Predicated region
    $region62: #{forward.1} parent=1 // pred_check
      _
    $region63: #{forward.1} parent=1 // pred_check_branch
      %773 = sbr.rel (0) target = $region65
    $region64: #{forward.1} parent=1 // pred_region
      %775 = vsyncadd [#allocation3], 0
      %s776 = sshll.u32 [#allocation5], 4
      %s777 = int_to_ptr.vmem [resolvable:$true] %s776
      %s778 = sshll.u32 %s14, 4
      %s779 = int_to_ptr.hbm [resolvable:$true] %s778
      %784 = dma.vmem_to_hbm [thread:$0]  %s777, 1024, %s779, [#allocation3], 128, 128, 8
    $region65: #{forward.1} parent=1 // pred_fallthru
      _
    // Predicated region
    $region66: #{forward.1} parent=1 // pred_check
      _
    $region67: #{forward.1} parent=1 // pred_check_branch
      %786 = sbr.rel (0) target = $region69
    $region68: #{forward.1} parent=1 // pred_region
      %788 = dma.done [#allocation3], 1024
    $region69: #{forward.1} parent=1 // pred_fallthru
      _
    %789 = vsyncpa [#allocation3], 1
    %790 = vsyncpa [#allocation4], 1

</llo_original>
